<compile_context>
chip_gen: v7x
topology: tpu7x:2x2x1
jax: 0.10.0
libtpu: 0.0.40
codegen_flags: <defaults>
</compile_context>

<pallas_src>
import jax
import jax.numpy as jnp
from jax import lax
from jax.experimental import pallas as pl
from jax.experimental.pallas import tpu as pltpu


def _round_up(x, m):
    return (x + m - 1) // m * m


def _grn_kernel(
    x_ref, c_ref,
    w_in_ref, w_ctx_ref, b1_ref,
    w_hid_ref, b_hid_ref,
    w_gate_ref, b_gate_ref,
    w_out_ref, w_skip_ref, b2_ref,
    ln_g_ref, ln_b_ref,
    o_ref,
):
    x = x_ref[...]   # [tile_n, input_dim]
    c = c_ref[...]   # [tile_n, context_dim]

    # h = relu(input_proj(x) + context_proj(c)); bias pre-fused: b1 = b_in + b_ctx.
    h = jnp.dot(x, w_in_ref[...], preferred_element_type=jnp.float32)
    h = h + jnp.dot(c, w_ctx_ref[...], preferred_element_type=jnp.float32)
    h = jnp.maximum(h + b1_ref[...], 0.0)

    # hidden_layer
    h = jnp.dot(h, w_hid_ref[...], preferred_element_type=jnp.float32) + b_hid_ref[...]

    # gate = sigmoid(Linear(h)); x = dropout(h * g)  (dropout == identity, eval)
    g = jax.nn.sigmoid(
        jnp.dot(h, w_gate_ref[...], preferred_element_type=jnp.float32) + b_gate_ref[...]
    )
    h = h * g

    # output_proj + skip_proj (fused skip on x), combined bias b2 = b_out + b_skip.
    y = jnp.dot(h, w_out_ref[...], preferred_element_type=jnp.float32)
    y = y + jnp.dot(x, w_skip_ref[...], preferred_element_type=jnp.float32)
    y = y + b2_ref[...]

    # LayerNorm over the exact output_dim lanes (no padding -> no mask needed).
    mean = jnp.mean(y, axis=-1, keepdims=True)
    diff = y - mean
    var = jnp.mean(diff * diff, axis=-1, keepdims=True)
    y = diff * lax.rsqrt(var + 1e-5)
    y = y * ln_g_ref[...] + ln_b_ref[...]

    o_ref[...] = y.astype(o_ref.dtype)


def gated_residual_network(x, context, params, *, tile_n=2048,
                           vmem_budget_bytes=24 * 1024 * 1024):
    """x: [batch, seq, input_dim]; context: [batch, seq, context_dim] (required)."""
    assert context is not None, "this kernel path requires a context tensor"
    batch, seq, input_dim = x.shape
    context_dim = context.shape[-1]
    hidden_dim = params["w_in"].shape[1]
    output_dim = params["w_out"].shape[1]
    n = batch * seq
    act_dtype = x.dtype
    itemsize = jnp.dtype(act_dtype).itemsize

    # ---- flatten tokens (metadata-only reshapes; NO concat / pad HBM passes) ----
    x2 = x.reshape(n, input_dim)
    c2 = context.reshape(n, context_dim)

    # ---- derive / fuse parameters (tiny, once per call; weights in act dtype) ----
    wdt = act_dtype
    w_in = params["w_in"].astype(wdt)
    w_ctx = params["w_ctx"].astype(wdt)
    w_hid = params["w_hid"].astype(wdt)
    w_gate = params["w_gate"].astype(wdt)
    w_out = params["w_out"].astype(wdt)
    if params.get("w_skip") is not None:
        w_skip = params["w_skip"].astype(wdt)
        b_skip = params["b_skip"].astype(jnp.float32)
    else:
        # input_dim == output_dim: skip connection is the identity.
        w_skip = jnp.eye(input_dim, output_dim, dtype=wdt)
        b_skip = jnp.zeros((1, output_dim), jnp.float32)
    b1 = (params["b_in"] + params["b_ctx"]).astype(jnp.float32)
    b_hid = params["b_hid"].astype(jnp.float32)
    b_gate = params["b_gate"].astype(jnp.float32)
    b2 = (params["b_out"].astype(jnp.float32) + b_skip)
    ln_g = params["ln_g"].astype(jnp.float32)
    ln_b = params["ln_b"].astype(jnp.float32)

    weights = [w_in, w_ctx, b1, w_hid, b_hid, w_gate, b_gate,
               w_out, w_skip, b2, ln_g, ln_b]

    # ---- row tile selection (dtype-, megacore- and VMEM-aware) ----
    sublane = 8 * max(1, 4 // itemsize)              # 8 for f32, 16 for bf16
    tile = _round_up(min(tile_n, n), sublane)
    if n > sublane:
        # ensure >= 2 grid steps so both v7x TensorCores get work
        tile = min(tile, _round_up(pl.cdiv(n, 2), sublane))
    # VMEM budget: double-buffered x/ctx/out tiles + live f32 intermediates.
    w_bytes = 2 * sum(int(w.size) * w.dtype.itemsize for w in weights)
    per_row = (2 * itemsize * (input_dim + context_dim + output_dim)
               + 4 * (3 * hidden_dim + output_dim))
    cap = ((vmem_budget_bytes - w_bytes) // per_row) // sublane * sublane
    tile = max(sublane, min(tile, max(sublane, cap)))
    grid = (pl.cdiv(n, tile),)

    def row_spec(feat):
        return pl.BlockSpec((tile, feat), lambda i: (i, 0))

    def full_spec(a):
        return pl.BlockSpec(a.shape, lambda i: (0,) * a.ndim)

    out = pl.pallas_call(
        _grn_kernel,
        out_shape=jax.ShapeDtypeStruct((n, output_dim), act_dtype),
        grid_spec=pltpu.PrefetchScalarGridSpec(
            num_scalar_prefetch=0,
            grid=grid,
            in_specs=[row_spec(input_dim), row_spec(context_dim)]
                     + [full_spec(w) for w in weights],
            out_specs=row_spec(output_dim),
        ),
        compiler_params=pltpu.CompilerParams(
            dimension_semantics=("parallel",),
            vmem_limit_bytes=32 * 1024 * 1024,
        ),
    )(x2, c2, *weights)

    return out.reshape(batch, seq, output_dim)


def init_params(key, input_dim, hidden_dim, output_dim, context_dim):
    """Deterministic synthetic init. Weights stored as [in_features, out_features]
    (already transposed from the PyTorch nn.Linear [out, in] layout)."""
    keys = jax.random.split(key, 16)

    def linear(kw, kb, fan_in, fan_out):
        bound = 1.0 / jnp.sqrt(fan_in)
        w = jax.random.uniform(kw, (fan_in, fan_out), jnp.float32, -bound, bound)
        b = jax.random.uniform(kb, (1, fan_out), jnp.float32, -bound, bound)
        return w, b

    p = {}
    p["w_in"], p["b_in"] = linear(keys[0], keys[1], input_dim, hidden_dim)
    p["w_ctx"], p["b_ctx"] = linear(keys[2], keys[3], context_dim, hidden_dim)
    p["w_hid"], p["b_hid"] = linear(keys[4], keys[5], hidden_dim, hidden_dim)
    p["w_gate"], p["b_gate"] = linear(keys[6], keys[7], hidden_dim, hidden_dim)
    p["w_out"], p["b_out"] = linear(keys[8], keys[9], hidden_dim, output_dim)
    p["w_skip"], p["b_skip"] = linear(keys[10], keys[11], input_dim, output_dim)
    # nn.LayerNorm default init: weight=1, bias=0
    p["ln_g"] = jnp.ones((1, output_dim), jnp.float32)
    p["ln_b"] = jnp.zeros((1, output_dim), jnp.float32)
    return p


def grn_reference(x, context, p):
    """Pure-JAX reference (unfused) for correctness checking."""
    skip = x @ p["w_skip"] + p["b_skip"]
    h = x @ p["w_in"] + p["b_in"] + context @ p["w_ctx"] + p["b_ctx"]
    h = jnp.maximum(h, 0.0)
    h = h @ p["w_hid"] + p["b_hid"]
    g = jax.nn.sigmoid(h @ p["w_gate"] + p["b_gate"])
    h = h * g
    y = h @ p["w_out"] + p["b_out"] + skip
    mean = jnp.mean(y, axis=-1, keepdims=True)
    var = jnp.mean((y - mean) ** 2, axis=-1, keepdims=True)
    return (y - mean) * jax.lax.rsqrt(var + 1e-5) * p["ln_g"] + p["ln_b"]


if __name__ == "__main__":
    batch, seq = 2, 8
    input_dim, hidden_dim, output_dim, context_dim = 16, 32, 24, 8

    key = jax.random.PRNGKey(0)
    k_x, k_c, k_p = jax.random.split(key, 3)

    x = jax.random.normal(k_x, (batch, seq, input_dim), jnp.float32)
    context = jax.random.normal(k_c, (batch, seq, context_dim), jnp.float32)
    params = init_params(k_p, input_dim, hidden_dim, output_dim, context_dim)

    out = gated_residual_network(x, context, params)
    out = jax.block_until_ready(out)
    ref = grn_reference(x, context, params)
    assert out.shape == (batch, seq, output_dim)
    assert jnp.allclose(out, ref, atol=1e-4, rtol=1e-4), "mismatch vs reference"

    # Ragged-row case: N not a multiple of the row tile exercises the masked
    # tail block (no wrapper-side padding pass anymore).
    b2_, s2_ = 3, 7
    x_r = jax.random.normal(k_x, (b2_, s2_, input_dim), jnp.float32)
    c_r = jax.random.normal(k_c, (b2_, s2_, context_dim), jnp.float32)
    out_r = jax.block_until_ready(gated_residual_network(x_r, c_r, params))
    ref_r = grn_reference(x_r, c_r, params)
    assert jnp.allclose(out_r, ref_r, atol=1e-4, rtol=1e-4), "mismatch (ragged tail)"

    print("KERNEL_OK")
</pallas_src>

<mosaic_0001>
module attributes {stable_mosaic.version = 11 : i64} {
  func.func @_grn_kernel(%arg0: i32, %arg1: memref<8x16xf32, #tpu.memory_space<vmem>>, %arg2: memref<8x8xf32, #tpu.memory_space<vmem>>, %arg3: memref<16x32xf32, #tpu.memory_space<vmem>>, %arg4: memref<8x32xf32, #tpu.memory_space<vmem>>, %arg5: memref<1x32xf32, #tpu.memory_space<vmem>>, %arg6: memref<32x32xf32, #tpu.memory_space<vmem>>, %arg7: memref<1x32xf32, #tpu.memory_space<vmem>>, %arg8: memref<32x32xf32, #tpu.memory_space<vmem>>, %arg9: memref<1x32xf32, #tpu.memory_space<vmem>>, %arg10: memref<32x24xf32, #tpu.memory_space<vmem>>, %arg11: memref<16x24xf32, #tpu.memory_space<vmem>>, %arg12: memref<1x24xf32, #tpu.memory_space<vmem>>, %arg13: memref<1x24xf32, #tpu.memory_space<vmem>>, %arg14: memref<1x24xf32, #tpu.memory_space<vmem>>, %arg15: memref<8x24xf32, #tpu.memory_space<vmem>>) attributes {dimension_semantics = [#tpu.dimension_semantics<parallel>], iteration_bounds = array<i64: 2>, scalar_prefetch = 0 : i64, scratch_operands = 0 : i64, tpu.core_type = #tpu.core_type<tc>, window_params = [{transform_indices = @transform_0, window_bounds = array<i64: 8, 16>}, {transform_indices = @transform_1, window_bounds = array<i64: 8, 8>}, {pipeline_mode = #tpu.pipeline_mode<synchronous>, transform_indices = @transform_2, window_bounds = array<i64: 16, 32>}, {pipeline_mode = #tpu.pipeline_mode<synchronous>, transform_indices = @transform_3, window_bounds = array<i64: 8, 32>}, {pipeline_mode = #tpu.pipeline_mode<synchronous>, transform_indices = @transform_4, window_bounds = array<i64: 1, 32>}, {pipeline_mode = #tpu.pipeline_mode<synchronous>, transform_indices = @transform_5, window_bounds = array<i64: 32, 32>}, {pipeline_mode = #tpu.pipeline_mode<synchronous>, transform_indices = @transform_6, window_bounds = array<i64: 1, 32>}, {pipeline_mode = #tpu.pipeline_mode<synchronous>, transform_indices = @transform_7, window_bounds = array<i64: 32, 32>}, {pipeline_mode = #tpu.pipeline_mode<synchronous>, transform_indices = @transform_8, window_bounds = array<i64: 1, 32>}, {pipeline_mode = #tpu.pipeline_mode<synchronous>, transform_indices = @transform_9, window_bounds = array<i64: 32, 24>}, {pipeline_mode = #tpu.pipeline_mode<synchronous>, transform_indices = @transform_10, window_bounds = array<i64: 16, 24>}, {pipeline_mode = #tpu.pipeline_mode<synchronous>, transform_indices = @transform_11, window_bounds = array<i64: 1, 24>}, {pipeline_mode = #tpu.pipeline_mode<synchronous>, transform_indices = @transform_12, window_bounds = array<i64: 1, 24>}, {pipeline_mode = #tpu.pipeline_mode<synchronous>, transform_indices = @transform_13, window_bounds = array<i64: 1, 24>}, {transform_indices = @transform_14, window_bounds = array<i64: 8, 24>}]} {
    %c0 = arith.constant 0 : index
    %c0_0 = arith.constant 0 : index
    %0 = vector.load %arg1[%c0, %c0_0] : memref<8x16xf32, #tpu.memory_space<vmem>>, vector<8x16xf32>
    %c0_1 = arith.constant 0 : index
    %c0_2 = arith.constant 0 : index
    %1 = vector.load %arg2[%c0_1, %c0_2] : memref<8x8xf32, #tpu.memory_space<vmem>>, vector<8x8xf32>
    %c0_3 = arith.constant 0 : index
    %c0_4 = arith.constant 0 : index
    %2 = vector.load %arg3[%c0_3, %c0_4] : memref<16x32xf32, #tpu.memory_space<vmem>>, vector<16x32xf32>
    %cst = arith.constant dense<0.000000e+00> : vector<8x32xf32>
    %3 = tpu.matmul %0, %2, %cst {dimension_numbers = #tpu.dot_dimension_numbers<[1], [0], [0], [1], [0, 0, 1, 1], [], []>} : vector<8x16xf32>, vector<16x32xf32>, vector<8x32xf32> -> vector<8x32xf32>
    %c0_5 = arith.constant 0 : index
    %c0_6 = arith.constant 0 : index
    %4 = vector.load %arg4[%c0_5, %c0_6] : memref<8x32xf32, #tpu.memory_space<vmem>>, vector<8x32xf32>
    %cst_7 = arith.constant dense<0.000000e+00> : vector<8x32xf32>
    %5 = tpu.matmul %1, %4, %cst_7 {dimension_numbers = #tpu.dot_dimension_numbers<[1], [0], [0], [1], [0, 0, 1, 1], [], []>} : vector<8x8xf32>, vector<8x32xf32>, vector<8x32xf32> -> vector<8x32xf32>
    %6 = arith.addf %3, %5 : vector<8x32xf32>
    %c0_8 = arith.constant 0 : index
    %c0_9 = arith.constant 0 : index
    %7 = vector.load %arg5[%c0_8, %c0_9] : memref<1x32xf32, #tpu.memory_space<vmem>>, vector<1x32xf32>
    %8 = vector.broadcast %7 : vector<1x32xf32> to vector<8x32xf32>
    %9 = arith.addf %6, %8 : vector<8x32xf32>
    %cst_10 = arith.constant 0.000000e+00 : f32
    %10 = vector.broadcast %cst_10 : f32 to vector<8x32xf32>
    %11 = arith.maximumf %9, %10 : vector<8x32xf32>
    %c0_11 = arith.constant 0 : index
    %c0_12 = arith.constant 0 : index
    %12 = vector.load %arg6[%c0_11, %c0_12] : memref<32x32xf32, #tpu.memory_space<vmem>>, vector<32x32xf32>
    %cst_13 = arith.constant dense<0.000000e+00> : vector<8x32xf32>
    %13 = tpu.matmul %11, %12, %cst_13 {dimension_numbers = #tpu.dot_dimension_numbers<[1], [0], [0], [1], [0, 0, 1, 1], [], []>} : vector<8x32xf32>, vector<32x32xf32>, vector<8x32xf32> -> vector<8x32xf32>
    %c0_14 = arith.constant 0 : index
    %c0_15 = arith.constant 0 : index
    %14 = vector.load %arg7[%c0_14, %c0_15] : memref<1x32xf32, #tpu.memory_space<vmem>>, vector<1x32xf32>
    %15 = vector.broadcast %14 : vector<1x32xf32> to vector<8x32xf32>
    %16 = arith.addf %13, %15 : vector<8x32xf32>
    %c0_16 = arith.constant 0 : index
    %c0_17 = arith.constant 0 : index
    %17 = vector.load %arg8[%c0_16, %c0_17] : memref<32x32xf32, #tpu.memory_space<vmem>>, vector<32x32xf32>
    %cst_18 = arith.constant dense<0.000000e+00> : vector<8x32xf32>
    %18 = tpu.matmul %16, %17, %cst_18 {dimension_numbers = #tpu.dot_dimension_numbers<[1], [0], [0], [1], [0, 0, 1, 1], [], []>} : vector<8x32xf32>, vector<32x32xf32>, vector<8x32xf32> -> vector<8x32xf32>
    %c0_19 = arith.constant 0 : index
    %c0_20 = arith.constant 0 : index
    %19 = vector.load %arg9[%c0_19, %c0_20] : memref<1x32xf32, #tpu.memory_space<vmem>>, vector<1x32xf32>
    %20 = vector.broadcast %19 : vector<1x32xf32> to vector<8x32xf32>
    %21 = arith.addf %18, %20 : vector<8x32xf32>
    %22 = arith.negf %21 : vector<8x32xf32>
    %23 = math.exp %22 : vector<8x32xf32>
    %cst_21 = arith.constant 1.000000e+00 : f32
    %24 = vector.broadcast %cst_21 : f32 to vector<8x32xf32>
    %25 = arith.addf %24, %23 : vector<8x32xf32>
    %26 = arith.divf %24, %25 : vector<8x32xf32>
    %27 = arith.mulf %16, %26 : vector<8x32xf32>
    %c0_22 = arith.constant 0 : index
    %c0_23 = arith.constant 0 : index
    %28 = vector.load %arg10[%c0_22, %c0_23] : memref<32x24xf32, #tpu.memory_space<vmem>>, vector<32x24xf32>
    %cst_24 = arith.constant dense<0.000000e+00> : vector<8x24xf32>
    %29 = tpu.matmul %27, %28, %cst_24 {dimension_numbers = #tpu.dot_dimension_numbers<[1], [0], [0], [1], [0, 0, 1, 1], [], []>} : vector<8x32xf32>, vector<32x24xf32>, vector<8x24xf32> -> vector<8x24xf32>
    %c0_25 = arith.constant 0 : index
    %c0_26 = arith.constant 0 : index
    %30 = vector.load %arg11[%c0_25, %c0_26] : memref<16x24xf32, #tpu.memory_space<vmem>>, vector<16x24xf32>
    %cst_27 = arith.constant dense<0.000000e+00> : vector<8x24xf32>
    %31 = tpu.matmul %0, %30, %cst_27 {dimension_numbers = #tpu.dot_dimension_numbers<[1], [0], [0], [1], [0, 0, 1, 1], [], []>} : vector<8x16xf32>, vector<16x24xf32>, vector<8x24xf32> -> vector<8x24xf32>
    %32 = arith.addf %29, %31 : vector<8x24xf32>
    %c0_28 = arith.constant 0 : index
    %c0_29 = arith.constant 0 : index
    %33 = vector.load %arg12[%c0_28, %c0_29] : memref<1x24xf32, #tpu.memory_space<vmem>>, vector<1x24xf32>
    %34 = vector.broadcast %33 : vector<1x24xf32> to vector<8x24xf32>
    %35 = arith.addf %32, %34 : vector<8x24xf32>
    %cst_30 = arith.constant dense<0.000000e+00> : vector<8xf32>
    %36 = vector.multi_reduction <add>, %35, %cst_30 [1] : vector<8x24xf32> to vector<8xf32>
    %37 = vector.shape_cast %36 : vector<8xf32> to vector<8x1xf32>
    %cst_31 = arith.constant 2.400000e+01 : f32
    %38 = vector.broadcast %cst_31 : f32 to vector<8x1xf32>
    %39 = arith.divf %37, %38 : vector<8x1xf32>
    %40 = vector.broadcast %39 : vector<8x1xf32> to vector<8x24xf32>
    %41 = arith.subf %35, %40 : vector<8x24xf32>
    %42 = arith.mulf %41, %41 : vector<8x24xf32>
    %cst_32 = arith.constant dense<0.000000e+00> : vector<8xf32>
    %43 = vector.multi_reduction <add>, %42, %cst_32 [1] : vector<8x24xf32> to vector<8xf32>
    %44 = vector.shape_cast %43 : vector<8xf32> to vector<8x1xf32>
    %cst_33 = arith.constant 2.400000e+01 : f32
    %45 = vector.broadcast %cst_33 : f32 to vector<8x1xf32>
    %46 = arith.divf %44, %45 : vector<8x1xf32>
    %cst_34 = arith.constant 9.99999974E-6 : f32
    %47 = vector.broadcast %cst_34 : f32 to vector<8x1xf32>
    %48 = arith.addf %46, %47 : vector<8x1xf32>
    %49 = math.rsqrt %48 : vector<8x1xf32>
    %50 = vector.broadcast %49 : vector<8x1xf32> to vector<8x24xf32>
    %51 = arith.mulf %41, %50 : vector<8x24xf32>
    %c0_35 = arith.constant 0 : index
    %c0_36 = arith.constant 0 : index
    %52 = vector.load %arg13[%c0_35, %c0_36] : memref<1x24xf32, #tpu.memory_space<vmem>>, vector<1x24xf32>
    %53 = vector.broadcast %52 : vector<1x24xf32> to vector<8x24xf32>
    %54 = arith.mulf %51, %53 : vector<8x24xf32>
    %c0_37 = arith.constant 0 : index
    %c0_38 = arith.constant 0 : index
    %55 = vector.load %arg14[%c0_37, %c0_38] : memref<1x24xf32, #tpu.memory_space<vmem>>, vector<1x24xf32>
    %56 = vector.broadcast %55 : vector<1x24xf32> to vector<8x24xf32>
    %57 = arith.addf %54, %56 : vector<8x24xf32>
    %c0_39 = arith.constant 0 : index
    %c0_40 = arith.constant 0 : index
    %58 = vector.load %arg15[%c0_39, %c0_40] : memref<8x24xf32, #tpu.memory_space<vmem>>, vector<8x24xf32>
    tpu.vector_store %arg15[%c0_39, %c0_40], %57 {strides = array<i32>} : memref<8x24xf32, #tpu.memory_space<vmem>>, vector<8x24xf32>,
    return
  }
  func.func @transform_0(%arg0: i32) -> (i32, i32) {
    %c0_i32 = arith.constant 0 : i32
    %c0_i32_0 = arith.constant 0 : i32
    return %arg0, %c0_i32 : i32, i32
  }
  func.func @transform_1(%arg0: i32) -> (i32, i32) {
    %c0_i32 = arith.constant 0 : i32
    %c0_i32_0 = arith.constant 0 : i32
    return %arg0, %c0_i32 : i32, i32
  }
  func.func @transform_2(%arg0: i32) -> (i32, i32) {
    %c0_i32 = arith.constant 0 : i32
    %c0_i32_0 = arith.constant 0 : i32
    %c0_i32_1 = arith.constant 0 : i32
    return %c0_i32, %c0_i32_0 : i32, i32
  }
  func.func @transform_3(%arg0: i32) -> (i32, i32) {
    %c0_i32 = arith.constant 0 : i32
    %c0_i32_0 = arith.constant 0 : i32
    %c0_i32_1 = arith.constant 0 : i32
    return %c0_i32, %c0_i32_0 : i32, i32
  }
  func.func @transform_4(%arg0: i32) -> (i32, i32) {
    %c0_i32 = arith.constant 0 : i32
    %c0_i32_0 = arith.constant 0 : i32
    %c0_i32_1 = arith.constant 0 : i32
    return %c0_i32, %c0_i32_0 : i32, i32
  }
  func.func @transform_5(%arg0: i32) -> (i32, i32) {
    %c0_i32 = arith.constant 0 : i32
    %c0_i32_0 = arith.constant 0 : i32
    %c0_i32_1 = arith.constant 0 : i32
    return %c0_i32, %c0_i32_0 : i32, i32
  }
  func.func @transform_6(%arg0: i32) -> (i32, i32) {
    %c0_i32 = arith.constant 0 : i32
    %c0_i32_0 = arith.constant 0 : i32
    %c0_i32_1 = arith.constant 0 : i32
    return %c0_i32, %c0_i32_0 : i32, i32
  }
  func.func @transform_7(%arg0: i32) -> (i32, i32) {
    %c0_i32 = arith.constant 0 : i32
    %c0_i32_0 = arith.constant 0 : i32
    %c0_i32_1 = arith.constant 0 : i32
    return %c0_i32, %c0_i32_0 : i32, i32
  }
  func.func @transform_8(%arg0: i32) -> (i32, i32) {
    %c0_i32 = arith.constant 0 : i32
    %c0_i32_0 = arith.constant 0 : i32
    %c0_i32_1 = arith.constant 0 : i32
    return %c0_i32, %c0_i32_0 : i32, i32
  }
  func.func @transform_9(%arg0: i32) -> (i32, i32) {
    %c0_i32 = arith.constant 0 : i32
    %c0_i32_0 = arith.constant 0 : i32
    %c0_i32_1 = arith.constant 0 : i32
    return %c0_i32, %c0_i32_0 : i32, i32
  }
  func.func @transform_10(%arg0: i32) -> (i32, i32) {
    %c0_i32 = arith.constant 0 : i32
    %c0_i32_0 = arith.constant 0 : i32
    %c0_i32_1 = arith.constant 0 : i32
    return %c0_i32, %c0_i32_0 : i32, i32
  }
  func.func @transform_11(%arg0: i32) -> (i32, i32) {
    %c0_i32 = arith.constant 0 : i32
    %c0_i32_0 = arith.constant 0 : i32
    %c0_i32_1 = arith.constant 0 : i32
    return %c0_i32, %c0_i32_0 : i32, i32
  }
  func.func @transform_12(%arg0: i32) -> (i32, i32) {
    %c0_i32 = arith.constant 0 : i32
    %c0_i32_0 = arith.constant 0 : i32
    %c0_i32_1 = arith.constant 0 : i32
    return %c0_i32, %c0_i32_0 : i32, i32
  }
  func.func @transform_13(%arg0: i32) -> (i32, i32) {
    %c0_i32 = arith.constant 0 : i32
    %c0_i32_0 = arith.constant 0 : i32
    %c0_i32_1 = arith.constant 0 : i32
    return %c0_i32, %c0_i32_0 : i32, i32
  }
  func.func @transform_14(%arg0: i32) -> (i32, i32) {
    %c0_i32 = arith.constant 0 : i32
    %c0_i32_0 = arith.constant 0 : i32
    return %arg0, %c0_i32 : i32, i32
  }
}

</mosaic_0001>

<llo_original>
// kernel: tpu_custom_call.1
$region0: #{tpu_custom_call.1}
  #allocation0 [shape = 'u32[]', space=smem, size = 0x4, offset = 0x4, fixed_abs, tag = 'smem constant byte address 0x4 - core index']
  #allocation1 [shape = 'u32[144,128]{1,0:T(1,128)}', space=vmem, size = 0x12000, scoped, tag = 'internal scratch']
  %s0 = inlined_call_operand.hbm [shape: f32[16,16], index: 0, kind: input, shape index: {}]
  %s1 = inlined_call_operand.vmem [shape: f32[16,8], index: 1, kind: input, shape index: {}]
  %s2 = inlined_call_operand.hbm [shape: f32[16,32], index: 2, kind: input, shape index: {}]
  %s3 = inlined_call_operand.hbm [shape: f32[8,32], index: 3, kind: input, shape index: {}]
  %s4 = inlined_call_operand.vmem [shape: f32[1,32], index: 4, kind: input, shape index: {}]
  %s5 = inlined_call_operand.vmem [shape: f32[32,32], index: 5, kind: input, shape index: {}]
  %s6 = inlined_call_operand.vmem [shape: f32[1,32], index: 6, kind: input, shape index: {}]
  %s7 = inlined_call_operand.vmem [shape: f32[32,32], index: 7, kind: input, shape index: {}]
  %s8 = inlined_call_operand.vmem [shape: f32[1,32], index: 8, kind: input, shape index: {}]
  %s9 = inlined_call_operand.vmem [shape: f32[32,24], index: 9, kind: input, shape index: {}]
  %s10 = inlined_call_operand.vmem [shape: f32[16,24], index: 10, kind: input, shape index: {}]
  %s11 = inlined_call_operand.vmem [shape: f32[1,24], index: 11, kind: input, shape index: {}]
  %s12 = inlined_call_operand.vmem [shape: f32[1,24], index: 12, kind: input, shape index: {}]
  %s13 = inlined_call_operand.vmem [shape: f32[1,24], index: 13, kind: input, shape index: {}]
  %s14 = inlined_call_operand.hbm [shape: f32[16,24], index: 14, kind: output, shape index: {}]
  %s15 = sld [smem:[#allocation0]]
  $region101: #{tpu_custom_call.1} parent=0
    _
  %s17 = ssub.s32 1, %s15
  %s18 = scalar_select 0, %s17, %s15
  $region1: #{tpu_custom_call.1} parent=0
    #allocation2 [shape = 'u8[8192]{0}', space=vmem, size = 0x2000, scoped, tag = 'input window, operand 0']
    #allocation3 [shape = 's32[2]{0}', space=sflag, size = 0x8, scoped, tag = 'scoped memory for tpu_custom_call.1']
    #allocation4 [shape = 's32[2]{0}', space=sflag, size = 0x8, scoped, tag = 'scoped memory for tpu_custom_call.1']
    #allocation5 [shape = 'u8[8192]{0}', space=vmem, size = 0x2000, scoped, tag = 'input window, operand 2, single buffered']
    #allocation6 [shape = 's32[1]{0}', space=sflag, size = 0x4, scoped, tag = 'scoped memory for tpu_custom_call.1']
    #allocation7 [shape = 'u8[4096]{0}', space=vmem, size = 0x1000, scoped, tag = 'input window, operand 3, single buffered']
    #allocation8 [shape = 'u8[8192]{0}', space=vmem, size = 0x2000, scoped, tag = 'output window, operand 0']
    %19 = vsyncpa [#allocation3], 0
    %s20 = scalar_lea.sflag [#allocation3], 1
    %21 = vsyncpa %s20, 0
    %22 = vsyncpa [#allocation6], 0
    %23 = vsyncpa [#allocation4], 0
    %s24 = scalar_lea.sflag [#allocation4], 1
    %25 = vsyncpa %s24, 0
    loop: start=0, step=1, limit=4
    $region2: #{tpu_custom_call.1} parent=1 // loop_pre_header
      _
    $region3: #{tpu_custom_call.1} parent=1 // loop_header
      %s27 = sphi 0, %s31
      %p28 = scmp.ge.s32.totalorder %s27, 4
      %s37 = sphi 0, %s39
      %s40 = sphi 0, %s37
      %s41 = sphi 0, %s40
      %s57 = sphi 0, %s41
      %s63 = sphi 0, %s65
      %s66 = sphi 0, %s63
      %s67 = sphi 0, %s66
      %s83 = sphi 0, %s67
      %s87 = sphi 0, %s87
      %s89 = sphi 0, %s87
      %s90 = sphi 0, %s89
      %s104 = sphi 0, %s90
      %s108 = sphi 0, %s108
      %s110 = sphi 0, %s108
      %s111 = sphi 0, %s110
      %s125 = sphi 0, %s111
      %s129 = sphi 0, %s129
      %s131 = sphi 0, %s129
      %s132 = sphi 0, %s131
      %s146 = sphi 0, %s132
      %s150 = sphi 0, %s150
      %s152 = sphi 0, %s150
      %s153 = sphi 0, %s152
      %s167 = sphi 0, %s153
      %s171 = sphi 0, %s171
      %s173 = sphi 0, %s171
      %s174 = sphi 0, %s173
      %s188 = sphi 0, %s174
      %s192 = sphi 0, %s192
      %s194 = sphi 0, %s192
      %s195 = sphi 0, %s194
      %s209 = sphi 0, %s195
      %s213 = sphi 0, %s213
      %s215 = sphi 0, %s213
      %s216 = sphi 0, %s215
      %s230 = sphi 0, %s216
      %s234 = sphi 0, %s234
      %s236 = sphi 0, %s234
      %s237 = sphi 0, %s236
      %s251 = sphi 0, %s237
      %s255 = sphi 0, %s255
      %s257 = sphi 0, %s255
      %s258 = sphi 0, %s257
      %s272 = sphi 0, %s258
      %s276 = sphi 0, %s276
      %s278 = sphi 0, %s276
      %s279 = sphi 0, %s278
      %s293 = sphi 0, %s279
      %s297 = sphi 0, %s297
      %s299 = sphi 0, %s297
      %s300 = sphi 0, %s299
      %s314 = sphi 0, %s300
      %s318 = sphi 0, %s318
      %s320 = sphi 0, %s318
      %s321 = sphi 0, %s320
      %s335 = sphi 0, %s321
      %s341 = sphi 0, %s343
      %s344 = sphi 0, %s341
      %s345 = sphi 0, %s344
      %s361 = sphi 0, %s345
    $region4: #{tpu_custom_call.1} parent=1 // loop_header_branch
      %30 = sbr.rel (%p28) target = $region8
    $region5: #{tpu_custom_call.1} parent=1 // loop_body
      %s32 = ssub.s32 %s27, 1
      %s33 = ssub.s32 %s27, 2
      %s34 = sadd.s32 %s27, 1
      %s35 = ssub.s32 %s27, %s34
      %p36 = scmp.eq.s32.totalorder %s35, 0
      %s38 = sadd.s32 %s37, 1
      %s39 = scalar_select %p36, %s37, %s38
      %p42 = pneg %p36
      %p43 = scmp.eq.s32.totalorder %s27, 1
      %p44 = por %p42, %p43
      %p45 = scmp.ne.s32.totalorder %s37, %s40
      %p46 = scmp.eq.s32.totalorder %s27, 0
      %p47 = por %p45, %p46
      %p48 = scmp.ne.s32.totalorder %s37, %s40
      %p49 = scmp.eq.s32.totalorder %s32, 1
      %p50 = por %p48, %p49
      %p51 = scmp.ne.s32.totalorder %s40, %s41
      %p52 = scmp.eq.s32.totalorder %s32, 0
      %p53 = por %p51, %p52
      %p54 = scmp.ne.s32.totalorder %s40, %s41
      %p55 = scmp.eq.s32.totalorder %s33, 1
      %p56 = por %p54, %p55
      %p58 = scmp.ne.s32.totalorder %s41, %s57
      %p59 = scmp.eq.s32.totalorder %s33, 0
      %p60 = por %p58, %p59
      %s61 = ssub.s32 %s27, %s34
      %p62 = scmp.eq.s32.totalorder %s61, 0
      %s64 = sadd.s32 %s63, 1
      %s65 = scalar_select %p62, %s63, %s64
      %p68 = pneg %p62
      %p69 = scmp.eq.s32.totalorder %s27, 1
      %p70 = por %p68, %p69
      %p71 = scmp.ne.s32.totalorder %s63, %s66
      %p72 = scmp.eq.s32.totalorder %s27, 0
      %p73 = por %p71, %p72
      %p74 = scmp.ne.s32.totalorder %s63, %s66
      %p75 = scmp.eq.s32.totalorder %s32, 1
      %p76 = por %p74, %p75
      %p77 = scmp.ne.s32.totalorder %s66, %s67
      %p78 = scmp.eq.s32.totalorder %s32, 0
      %p79 = por %p77, %p78
      %p80 = scmp.ne.s32.totalorder %s66, %s67
      %p81 = scmp.eq.s32.totalorder %s33, 1
      %p82 = por %p80, %p81
      %p84 = scmp.ne.s32.totalorder %s67, %s83
      %p85 = scmp.eq.s32.totalorder %s33, 0
      %p86 = por %p84, %p85
      %s88 = sadd.s32 %s87, 1
      %p91 = scmp.eq.s32.totalorder %s27, 1
      %p92 = scmp.ne.s32.totalorder %s87, %s89
      %p93 = scmp.eq.s32.totalorder %s27, 0
      %p94 = por %p92, %p93
      %p95 = scmp.ne.s32.totalorder %s87, %s89
      %p96 = scmp.eq.s32.totalorder %s32, 1
      %p97 = por %p95, %p96
      %p98 = scmp.ne.s32.totalorder %s89, %s90
      %p99 = scmp.eq.s32.totalorder %s32, 0
      %p100 = por %p98, %p99
      %p101 = scmp.ne.s32.totalorder %s89, %s90
      %p102 = scmp.eq.s32.totalorder %s33, 1
      %p103 = por %p101, %p102
      %p105 = scmp.ne.s32.totalorder %s90, %s104
      %p106 = scmp.eq.s32.totalorder %s33, 0
      %p107 = por %p105, %p106
      %s109 = sadd.s32 %s108, 1
      %p112 = scmp.eq.s32.totalorder %s27, 1
      %p113 = scmp.ne.s32.totalorder %s108, %s110
      %p114 = scmp.eq.s32.totalorder %s27, 0
      %p115 = por %p113, %p114
      %p116 = scmp.ne.s32.totalorder %s108, %s110
      %p117 = scmp.eq.s32.totalorder %s32, 1
      %p118 = por %p116, %p117
      %p119 = scmp.ne.s32.totalorder %s110, %s111
      %p120 = scmp.eq.s32.totalorder %s32, 0
      %p121 = por %p119, %p120
      %p122 = scmp.ne.s32.totalorder %s110, %s111
      %p123 = scmp.eq.s32.totalorder %s33, 1
      %p124 = por %p122, %p123
      %p126 = scmp.ne.s32.totalorder %s111, %s125
      %p127 = scmp.eq.s32.totalorder %s33, 0
      %p128 = por %p126, %p127
      %s130 = sadd.s32 %s129, 1
      %p133 = scmp.eq.s32.totalorder %s27, 1
      %p134 = scmp.ne.s32.totalorder %s129, %s131
      %p135 = scmp.eq.s32.totalorder %s27, 0
      %p136 = por %p134, %p135
      %p137 = scmp.ne.s32.totalorder %s129, %s131
      %p138 = scmp.eq.s32.totalorder %s32, 1
      %p139 = por %p137, %p138
      %p140 = scmp.ne.s32.totalorder %s131, %s132
      %p141 = scmp.eq.s32.totalorder %s32, 0
      %p142 = por %p140, %p141
      %p143 = scmp.ne.s32.totalorder %s131, %s132
      %p144 = scmp.eq.s32.totalorder %s33, 1
      %p145 = por %p143, %p144
      %p147 = scmp.ne.s32.totalorder %s132, %s146
      %p148 = scmp.eq.s32.totalorder %s33, 0
      %p149 = por %p147, %p148
      %s151 = sadd.s32 %s150, 1
      %p154 = scmp.eq.s32.totalorder %s27, 1
      %p155 = scmp.ne.s32.totalorder %s150, %s152
      %p156 = scmp.eq.s32.totalorder %s27, 0
      %p157 = por %p155, %p156
      %p158 = scmp.ne.s32.totalorder %s150, %s152
      %p159 = scmp.eq.s32.totalorder %s32, 1
      %p160 = por %p158, %p159
      %p161 = scmp.ne.s32.totalorder %s152, %s153
      %p162 = scmp.eq.s32.totalorder %s32, 0
      %p163 = por %p161, %p162
      %p164 = scmp.ne.s32.totalorder %s152, %s153
      %p165 = scmp.eq.s32.totalorder %s33, 1
      %p166 = por %p164, %p165
      %p168 = scmp.ne.s32.totalorder %s153, %s167
      %p169 = scmp.eq.s32.totalorder %s33, 0
      %p170 = por %p168, %p169
      %s172 = sadd.s32 %s171, 1
      %p175 = scmp.eq.s32.totalorder %s27, 1
      %p176 = scmp.ne.s32.totalorder %s171, %s173
      %p177 = scmp.eq.s32.totalorder %s27, 0
      %p178 = por %p176, %p177
      %p179 = scmp.ne.s32.totalorder %s171, %s173
      %p180 = scmp.eq.s32.totalorder %s32, 1
      %p181 = por %p179, %p180
      %p182 = scmp.ne.s32.totalorder %s173, %s174
      %p183 = scmp.eq.s32.totalorder %s32, 0
      %p184 = por %p182, %p183
      %p185 = scmp.ne.s32.totalorder %s173, %s174
      %p186 = scmp.eq.s32.totalorder %s33, 1
      %p187 = por %p185, %p186
      %p189 = scmp.ne.s32.totalorder %s174, %s188
      %p190 = scmp.eq.s32.totalorder %s33, 0
      %p191 = por %p189, %p190
      %s193 = sadd.s32 %s192, 1
      %p196 = scmp.eq.s32.totalorder %s27, 1
      %p197 = scmp.ne.s32.totalorder %s192, %s194
      %p198 = scmp.eq.s32.totalorder %s27, 0
      %p199 = por %p197, %p198
      %p200 = scmp.ne.s32.totalorder %s192, %s194
      %p201 = scmp.eq.s32.totalorder %s32, 1
      %p202 = por %p200, %p201
      %p203 = scmp.ne.s32.totalorder %s194, %s195
      %p204 = scmp.eq.s32.totalorder %s32, 0
      %p205 = por %p203, %p204
      %p206 = scmp.ne.s32.totalorder %s194, %s195
      %p207 = scmp.eq.s32.totalorder %s33, 1
      %p208 = por %p206, %p207
      %p210 = scmp.ne.s32.totalorder %s195, %s209
      %p211 = scmp.eq.s32.totalorder %s33, 0
      %p212 = por %p210, %p211
      %s214 = sadd.s32 %s213, 1
      %p217 = scmp.eq.s32.totalorder %s27, 1
      %p218 = scmp.ne.s32.totalorder %s213, %s215
      %p219 = scmp.eq.s32.totalorder %s27, 0
      %p220 = por %p218, %p219
      %p221 = scmp.ne.s32.totalorder %s213, %s215
      %p222 = scmp.eq.s32.totalorder %s32, 1
      %p223 = por %p221, %p222
      %p224 = scmp.ne.s32.totalorder %s215, %s216
      %p225 = scmp.eq.s32.totalorder %s32, 0
      %p226 = por %p224, %p225
      %p227 = scmp.ne.s32.totalorder %s215, %s216
      %p228 = scmp.eq.s32.totalorder %s33, 1
      %p229 = por %p227, %p228
      %p231 = scmp.ne.s32.totalorder %s216, %s230
      %p232 = scmp.eq.s32.totalorder %s33, 0
      %p233 = por %p231, %p232
      %s235 = sadd.s32 %s234, 1
      %p238 = scmp.eq.s32.totalorder %s27, 1
      %p239 = scmp.ne.s32.totalorder %s234, %s236
      %p240 = scmp.eq.s32.totalorder %s27, 0
      %p241 = por %p239, %p240
      %p242 = scmp.ne.s32.totalorder %s234, %s236
      %p243 = scmp.eq.s32.totalorder %s32, 1
      %p244 = por %p242, %p243
      %p245 = scmp.ne.s32.totalorder %s236, %s237
      %p246 = scmp.eq.s32.totalorder %s32, 0
      %p247 = por %p245, %p246
      %p248 = scmp.ne.s32.totalorder %s236, %s237
      %p249 = scmp.eq.s32.totalorder %s33, 1
      %p250 = por %p248, %p249
      %p252 = scmp.ne.s32.totalorder %s237, %s251
      %p253 = scmp.eq.s32.totalorder %s33, 0
      %p254 = por %p252, %p253
      %s256 = sadd.s32 %s255, 1
      %p259 = scmp.eq.s32.totalorder %s27, 1
      %p260 = scmp.ne.s32.totalorder %s255, %s257
      %p261 = scmp.eq.s32.totalorder %s27, 0
      %p262 = por %p260, %p261
      %p263 = scmp.ne.s32.totalorder %s255, %s257
      %p264 = scmp.eq.s32.totalorder %s32, 1
      %p265 = por %p263, %p264
      %p266 = scmp.ne.s32.totalorder %s257, %s258
      %p267 = scmp.eq.s32.totalorder %s32, 0
      %p268 = por %p266, %p267
      %p269 = scmp.ne.s32.totalorder %s257, %s258
      %p270 = scmp.eq.s32.totalorder %s33, 1
      %p271 = por %p269, %p270
      %p273 = scmp.ne.s32.totalorder %s258, %s272
      %p274 = scmp.eq.s32.totalorder %s33, 0
      %p275 = por %p273, %p274
      %s277 = sadd.s32 %s276, 1
      %p280 = scmp.eq.s32.totalorder %s27, 1
      %p281 = scmp.ne.s32.totalorder %s276, %s278
      %p282 = scmp.eq.s32.totalorder %s27, 0
      %p283 = por %p281, %p282
      %p284 = scmp.ne.s32.totalorder %s276, %s278
      %p285 = scmp.eq.s32.totalorder %s32, 1
      %p286 = por %p284, %p285
      %p287 = scmp.ne.s32.totalorder %s278, %s279
      %p288 = scmp.eq.s32.totalorder %s32, 0
      %p289 = por %p287, %p288
      %p290 = scmp.ne.s32.totalorder %s278, %s279
      %p291 = scmp.eq.s32.totalorder %s33, 1
      %p292 = por %p290, %p291
      %p294 = scmp.ne.s32.totalorder %s279, %s293
      %p295 = scmp.eq.s32.totalorder %s33, 0
      %p296 = por %p294, %p295
      %s298 = sadd.s32 %s297, 1
      %p301 = scmp.eq.s32.totalorder %s27, 1
      %p302 = scmp.ne.s32.totalorder %s297, %s299
      %p303 = scmp.eq.s32.totalorder %s27, 0
      %p304 = por %p302, %p303
      %p305 = scmp.ne.s32.totalorder %s297, %s299
      %p306 = scmp.eq.s32.totalorder %s32, 1
      %p307 = por %p305, %p306
      %p308 = scmp.ne.s32.totalorder %s299, %s300
      %p309 = scmp.eq.s32.totalorder %s32, 0
      %p310 = por %p308, %p309
      %p311 = scmp.ne.s32.totalorder %s299, %s300
      %p312 = scmp.eq.s32.totalorder %s33, 1
      %p313 = por %p311, %p312
      %p315 = scmp.ne.s32.totalorder %s300, %s314
      %p316 = scmp.eq.s32.totalorder %s33, 0
      %p317 = por %p315, %p316
      %s319 = sadd.s32 %s318, 1
      %p322 = scmp.eq.s32.totalorder %s27, 1
      %p323 = scmp.ne.s32.totalorder %s318, %s320
      %p324 = scmp.eq.s32.totalorder %s27, 0
      %p325 = por %p323, %p324
      %p326 = scmp.ne.s32.totalorder %s318, %s320
      %p327 = scmp.eq.s32.totalorder %s32, 1
      %p328 = por %p326, %p327
      %p329 = scmp.ne.s32.totalorder %s320, %s321
      %p330 = scmp.eq.s32.totalorder %s32, 0
      %p331 = por %p329, %p330
      %p332 = scmp.ne.s32.totalorder %s320, %s321
      %p333 = scmp.eq.s32.totalorder %s33, 1
      %p334 = por %p332, %p333
      %p336 = scmp.ne.s32.totalorder %s321, %s335
      %p337 = scmp.eq.s32.totalorder %s33, 0
      %p338 = por %p336, %p337
      %s339 = ssub.s32 %s27, %s34
      %p340 = scmp.eq.s32.totalorder %s339, 0
      %s342 = sadd.s32 %s341, 1
      %s343 = scalar_select %p340, %s341, %s342
      %p346 = pneg %p340
      %p347 = scmp.eq.s32.totalorder %s27, 1
      %p348 = por %p346, %p347
      %p349 = scmp.ne.s32.totalorder %s341, %s344
      %p350 = scmp.eq.s32.totalorder %s27, 0
      %p351 = por %p349, %p350
      %p352 = scmp.ne.s32.totalorder %s341, %s344
      %p353 = scmp.eq.s32.totalorder %s32, 1
      %p354 = por %p352, %p353
      %p355 = scmp.ne.s32.totalorder %s344, %s345
      %p356 = scmp.eq.s32.totalorder %s32, 0
      %p357 = por %p355, %p356
      %p358 = scmp.ne.s32.totalorder %s344, %s345
      %p359 = scmp.eq.s32.totalorder %s33, 1
      %p360 = por %p358, %p359
      %p362 = scmp.ne.s32.totalorder %s345, %s361
      %p363 = scmp.eq.s32.totalorder %s33, 0
      %p364 = por %p362, %p363
      %p365 = scmp.le.s32.totalorder 1, %s27
      %p366 = scmp.lt.s32.totalorder %s27, 3
      %p367 = pnand %p365, %p366
      %p368 = pneg %p367
      // Predicated region
      $region9: #{tpu_custom_call.1} parent=5 // pred_check
        _
      $region10: #{tpu_custom_call.1} parent=5 // pred_check_branch
        %370 = sbr.rel (%p367) target = $region12
      $region11: #{tpu_custom_call.1} parent=5 // pred_region
        %s371 = ssub.s32 %s27, 1
        // Predicated region
        $region13: #{tpu_custom_call.1} parent=11 // pred_check
          %p372 = pneg %p100
        $region14: #{tpu_custom_call.1} parent=11 // pred_check_branch
          %374 = sbr.rel (%p372) target = $region16
        $region15: #{tpu_custom_call.1} parent=11 // pred_region
          %s376 = ssub.s32 256, 256
          %377 = vsyncadd [#allocation6], %s376
          %s378 = sshll.u32 [#allocation5], 4
          %s379 = int_to_ptr.vmem [resolvable:$true] %s378
          %384 = dma.hbm_to_vmem [thread:$0]  %s2, 256, %s379, [#allocation6], 128, 128, 8
        $region16: #{tpu_custom_call.1} parent=11 // pred_fallthru
          _
        // Predicated region
        $region17: #{tpu_custom_call.1} parent=11 // pred_check
          %p385 = pneg %p121
        $region18: #{tpu_custom_call.1} parent=11 // pred_check_branch
          %387 = sbr.rel (%p385) target = $region20
        $region19: #{tpu_custom_call.1} parent=11 // pred_region
          %s389 = ssub.s32 128, 128
          %390 = vsyncadd [#allocation6], %s389
          %s392 = sshll.u32 [#allocation7], 4
          %s393 = int_to_ptr.vmem [resolvable:$true] %s392
          %395 = dma.hbm_to_vmem [thread:$0]  %s3, 128, %s393, [#allocation6]
        $region20: #{tpu_custom_call.1} parent=11 // pred_fallthru
          _
        // Predicated region
        $region21: #{tpu_custom_call.1} parent=11 // pred_check
          %p396 = pneg %p142
        $region22: #{tpu_custom_call.1} parent=11 // pred_check_branch
          %398 = sbr.rel (%p396) target = $region24
        $region23: #{tpu_custom_call.1} parent=11 // pred_region
          _
        $region24: #{tpu_custom_call.1} parent=11 // pred_fallthru
          _
        // Predicated region
        $region25: #{tpu_custom_call.1} parent=11 // pred_check
          %p399 = pneg %p163
        $region26: #{tpu_custom_call.1} parent=11 // pred_check_branch
          %401 = sbr.rel (%p399) target = $region28
        $region27: #{tpu_custom_call.1} parent=11 // pred_region
          _
        $region28: #{tpu_custom_call.1} parent=11 // pred_fallthru
          _
        // Predicated region
        $region29: #{tpu_custom_call.1} parent=11 // pred_check
          %p402 = pneg %p184
        $region30: #{tpu_custom_call.1} parent=11 // pred_check_branch
          %404 = sbr.rel (%p402) target = $region32
        $region31: #{tpu_custom_call.1} parent=11 // pred_region
          _
        $region32: #{tpu_custom_call.1} parent=11 // pred_fallthru
          _
        // Predicated region
        $region33: #{tpu_custom_call.1} parent=11 // pred_check
          %p405 = pneg %p205
        $region34: #{tpu_custom_call.1} parent=11 // pred_check_branch
          %407 = sbr.rel (%p405) target = $region36
        $region35: #{tpu_custom_call.1} parent=11 // pred_region
          _
        $region36: #{tpu_custom_call.1} parent=11 // pred_fallthru
          _
        // Predicated region
        $region37: #{tpu_custom_call.1} parent=11 // pred_check
          %p408 = pneg %p226
        $region38: #{tpu_custom_call.1} parent=11 // pred_check_branch
          %410 = sbr.rel (%p408) target = $region40
        $region39: #{tpu_custom_call.1} parent=11 // pred_region
          _
        $region40: #{tpu_custom_call.1} parent=11 // pred_fallthru
          _
        // Predicated region
        $region41: #{tpu_custom_call.1} parent=11 // pred_check
          %p411 = pneg %p247
        $region42: #{tpu_custom_call.1} parent=11 // pred_check_branch
          %413 = sbr.rel (%p411) target = $region44
        $region43: #{tpu_custom_call.1} parent=11 // pred_region
          _
        $region44: #{tpu_custom_call.1} parent=11 // pred_fallthru
          _
        // Predicated region
        $region45: #{tpu_custom_call.1} parent=11 // pred_check
          %p414 = pneg %p268
        $region46: #{tpu_custom_call.1} parent=11 // pred_check_branch
          %416 = sbr.rel (%p414) target = $region48
        $region47: #{tpu_custom_call.1} parent=11 // pred_region
          _
        $region48: #{tpu_custom_call.1} parent=11 // pred_fallthru
          _
        // Predicated region
        $region49: #{tpu_custom_call.1} parent=11 // pred_check
          %p417 = pneg %p289
        $region50: #{tpu_custom_call.1} parent=11 // pred_check_branch
          %419 = sbr.rel (%p417) target = $region52
        $region51: #{tpu_custom_call.1} parent=11 // pred_region
          _
        $region52: #{tpu_custom_call.1} parent=11 // pred_fallthru
          _
        // Predicated region
        $region53: #{tpu_custom_call.1} parent=11 // pred_check
          %p420 = pneg %p310
        $region54: #{tpu_custom_call.1} parent=11 // pred_check_branch
          %422 = sbr.rel (%p420) target = $region56
        $region55: #{tpu_custom_call.1} parent=11 // pred_region
          _
        $region56: #{tpu_custom_call.1} parent=11 // pred_fallthru
          _
        // Predicated region
        $region57: #{tpu_custom_call.1} parent=11 // pred_check
          %p423 = pneg %p331
        $region58: #{tpu_custom_call.1} parent=11 // pred_check_branch
          %425 = sbr.rel (%p423) target = $region60
        $region59: #{tpu_custom_call.1} parent=11 // pred_region
          _
        $region60: #{tpu_custom_call.1} parent=11 // pred_fallthru
          _
      $region12: #{tpu_custom_call.1} parent=5 // pred_fallthru
        _
      %p426 = scmp.lt.s32.totalorder %s27, 2
      // Predicated region
      $region61: #{tpu_custom_call.1} parent=5 // pred_check
        %p427 = pneg %p426
      $region62: #{tpu_custom_call.1} parent=5 // pred_check_branch
        %429 = sbr.rel (%p427) target = $region64
      $region63: #{tpu_custom_call.1} parent=5 // pred_region
        // Predicated region
        $region65: #{tpu_custom_call.1} parent=63 // pred_check
          %p430 = pneg %p47
        $region66: #{tpu_custom_call.1} parent=63 // pred_check_branch
          %432 = sbr.rel (%p430) target = $region68
        $region67: #{tpu_custom_call.1} parent=63 // pred_region
          %s433 = sand.u32 %s37, 1
          %s434 = scalar_lea.sflag [#allocation3], %s433
          %s435 = sand.u32 %s37, 1
          %s436 = smul.addr %s435, 8
          %s437 = scalar_lea.vmem [#allocation2], %s436
          %s439 = ssub.s32 128, 128
          %440 = vsyncadd %s434, %s439
          %s441 = smul.addr %s27, 128
          %s442 = scalar_lea.hbm %s0, %s441
          %s444 = sshll.u32 %s437, 4
          %s445 = int_to_ptr.vmem [resolvable:$true] %s444
          %447 = dma.hbm_to_vmem [thread:$0]  %s442, 128, %s445, %s434
        $region68: #{tpu_custom_call.1} parent=63 // pred_fallthru
          _
        // Predicated region
        $region69: #{tpu_custom_call.1} parent=63 // pred_check
          %p448 = pneg %p73
        $region70: #{tpu_custom_call.1} parent=63 // pred_check_branch
          %450 = sbr.rel (%p448) target = $region72
        $region71: #{tpu_custom_call.1} parent=63 // pred_region
          %p451 = scmp.lt.s32.totalorder %s27, 1
          %s452 = scalar_select %p451, %s27, 1
          %s453 = smul.addr %s452, 8
          %s454 = scalar_lea.vmem %s1, %s453
        $region72: #{tpu_custom_call.1} parent=63 // pred_fallthru
          _
      $region64: #{tpu_custom_call.1} parent=5 // pred_fallthru
        _
      %p455 = scmp.le.s32.totalorder 1, %s27
      %p456 = scmp.lt.s32.totalorder %s27, 3
      %p457 = pnand %p455, %p456
      %p458 = pneg %p457
      // Predicated region
      $region73: #{tpu_custom_call.1} parent=5 // pred_check
        _
      $region74: #{tpu_custom_call.1} parent=5 // pred_check_branch
        %460 = sbr.rel (%p457) target = $region76
      $region75: #{tpu_custom_call.1} parent=5 // pred_region
        %s461 = ssub.s32 %s27, 1
        %s462 = sand.u32 %s40, 1
        %s463 = scalar_lea.sflag [#allocation3], %s462
        %s464 = sand.u32 %s40, 1
        %s465 = smul.addr %s464, 8
        %s466 = scalar_lea.vmem [#allocation2], %s465
        // Predicated region
        $region77: #{tpu_custom_call.1} parent=75 // pred_check
          %p467 = pneg %p53
        $region78: #{tpu_custom_call.1} parent=75 // pred_check_branch
          %469 = sbr.rel (%p467) target = $region80
        $region79: #{tpu_custom_call.1} parent=75 // pred_region
          %470 = dma.done %s463, 128
        $region80: #{tpu_custom_call.1} parent=75 // pred_fallthru
          _
        // Predicated region
        $region81: #{tpu_custom_call.1} parent=75 // pred_check
          %p471 = pneg %p100
        $region82: #{tpu_custom_call.1} parent=75 // pred_check_branch
          %473 = sbr.rel (%p471) target = $region84
        $region83: #{tpu_custom_call.1} parent=75 // pred_region
          %474 = dma.done [#allocation6], 256
        $region84: #{tpu_custom_call.1} parent=75 // pred_fallthru
          _
        // Predicated region
        $region85: #{tpu_custom_call.1} parent=75 // pred_check
          %p475 = pneg %p121
        $region86: #{tpu_custom_call.1} parent=75 // pred_check_branch
          %477 = sbr.rel (%p475) target = $region88
        $region87: #{tpu_custom_call.1} parent=75 // pred_region
          %478 = dma.done [#allocation6], 128
        $region88: #{tpu_custom_call.1} parent=75 // pred_fallthru
          _
        %s479 = sand.u32 %s40, 1
        %s480 = scalar_lea.sflag [#allocation3], %s479
        %s481 = sand.u32 %s40, 1
        %s482 = smul.addr %s481, 8
        %s483 = scalar_lea.vmem [#allocation2], %s482
        %p484 = pneg %p53
        %p485 = pneg %p50
        %p486 = scmp.lt.s32.totalorder %s32, 1
        %s487 = scalar_select %p486, %s32, 1
        %s488 = smul.addr %s487, 8
        %s489 = scalar_lea.vmem %s1, %s488
        %p490 = pneg %p79
        %p491 = pneg %p76
        %p492 = pneg %p100
        %p493 = pneg %p97
        %p494 = pneg %p121
        %p495 = pneg %p118
        %p496 = pneg %p142
        %p497 = pneg %p139
        %p498 = pneg %p163
        %p499 = pneg %p160
        %p500 = pneg %p184
        %p501 = pneg %p181
        %p502 = pneg %p205
        %p503 = pneg %p202
        %p504 = pneg %p226
        %p505 = pneg %p223
        %p506 = pneg %p247
        %p507 = pneg %p244
        %p508 = pneg %p268
        %p509 = pneg %p265
        %p510 = pneg %p289
        %p511 = pneg %p286
        %p512 = pneg %p310
        %p513 = pneg %p307
        %p514 = pneg %p331
        %p515 = pneg %p328
        %p516 = pneg %p357
        %p517 = pneg %p354
        %s518 = sand.u32 %s344, 1
        %s519 = scalar_lea.sflag [#allocation4], %s518
        %s520 = sand.u32 %s344, 1
        %s521 = smul.addr %s520, 8
        %s522 = scalar_lea.vmem [#allocation8], %s521
        %p523 = scmp.lt.s32.totalorder %s32, 1
        %s524 = scalar_select %p523, %s32, 1
        %s525 = smul.addr %s524, 8
        %s526 = scalar_lea.vmem %s1, %s525
        %v527 = vld [vmem:[%s466] sm:$0xff]
        %v528 = vld [vmem:[%s526] sm:$0xff]
        %v529 = vld [vmem:[#allocation5] sm:$0xff]
        %v530 = vld [vmem:[#allocation5 + $0x8] sm:$0xff]
        %v531 = vld [vmem:[#allocation7] sm:$0xff]
        %vm532 = vcmask 64512
        %v534 = vsel %vm532, %v528, 0
        %536 = vmatprep.subr.mxu0 0.0
        %537 = vmatpush1.msra.mxu0 %v531
        %538 = vmatprep.subr.mxu0 0.0
        %539 = vmatpush1.msra.mxu0 0.0
        %540 = vmatprep.subr.mxu0 0.0
        %541 = vmatpush1.msra.mxu0 0.0
        %542 = vmatprep.subr.mxu0 0.0
        %543 = vmatpush1.msra.mxu0 0.0
        %544 = vmatprep.subr.mxu0 0.0
        %545 = vmatpush1.msra.mxu0 0.0
        %546 = vmatprep.subr.mxu0 0.0
        %547 = vmatpush1.msra.mxu0 0.0
        %548 = vmatprep.subr.mxu0 0.0
        %549 = vmatpush1.msra.mxu0 0.0
        %550 = vmatprep.subr.mxu0 0.0
        %551 = vmatpush1.msra.mxu0 0.0
        %552 = vmatprep.subr.mxu0 0.0
        %553 = vmatpush1.msra.mxu0 0.0
        %554 = vmatprep.subr.mxu0 0.0
        %555 = vmatpush1.msra.mxu0 0.0
        %556 = vmatprep.subr.mxu0 0.0
        %557 = vmatpush1.msra.mxu0 0.0
        %558 = vmatprep.subr.mxu0 0.0
        %559 = vmatpush1.msra.mxu0 0.0
        %560 = vmatprep.subr.mxu0 0.0
        %561 = vmatpush1.msra.mxu0 0.0
        %562 = vmatprep.subr.mxu0 0.0
        %563 = vmatpush1.msra.mxu0 0.0
        %564 = vmatprep.subr.mxu0 0.0
        %565 = vmatpush1.msra.mxu0 0.0
        %566 = vmatprep.subr.mxu0 0.0
        %567 = vmatpush1.msra.mxu0 0.0
        %568 = vmatprep.subr.mxu0 0.0
        %569 = vmatpush1.msra.mxu0 0.0
        %570 = vmatprep.subr.mxu0 0.0
        %571 = vmatpush1.msra.mxu0 0.0
        %572 = vmatprep.subr.mxu0 0.0
        %573 = vmatpush1.msra.mxu0 0.0
        %574 = vmatprep.subr.mxu0 0.0
        %575 = vmatpush1.msra.mxu0 0.0
        %576 = vmatprep.subr.mxu0 0.0
        %577 = vmatpush1.msra.mxu0 0.0
        %578 = vmatprep.subr.mxu0 0.0
        %579 = vmatpush1.msra.mxu0 0.0
        %580 = vmatprep.subr.mxu0 0.0
        %581 = vmatpush1.msra.mxu0 0.0
        %582 = vmatprep.subr.mxu0 0.0
        %583 = vmatpush1.msra.mxu0 0.0
        %584 = vmatprep.subr.mxu0 0.0
        %585 = vmatpush1.msra.mxu0 0.0
        %586 = vmatprep.subr.mxu0 0.0
        %587 = vmatpush1.msra.mxu0 0.0
        %588 = vmatprep.subr.mxu0 0.0
        %589 = vmatpush1.msra.mxu0 0.0
        %590 = vmatprep.subr.mxu0 0.0
        %591 = vmatpush1.msra.mxu0 0.0
        %592 = vmatprep.subr.mxu0 0.0
        %593 = vmatpush1.msra.mxu0 0.0
        %594 = vmatprep.subr.mxu0 0.0
        %595 = vmatpush1.msra.mxu0 0.0
        %596 = vmatprep.subr.mxu0 0.0
        %597 = vmatpush1.msra.mxu0 0.0
        %598 = vmatprep.subr.mxu0 0.0
        %599 = vmatpush1.msra.mxu0 0.0
        %600 = vmatprep.mubr.f32.mxu0 0.0
        %601 = vmatmul.mubr.f32.gmra.mrb[0].mxu0 %v534
        %v602 = vpop.f32.mrb[0].mxu0
        %v603 = vadd.f32 0.0, %v602
        %v604 = vpop.f32.mrb[0].mxu0
        %605 = vdwg.mxu0
        %vm606 = vcmask 130048
        %v608 = vsel %vm606, %v527, 0
        %610 = vmatprep.subr.mxu0 0.0
        %611 = vmatpush1.msra.mxu0 %v529
        %612 = vmatprep.subr.mxu0 0.0
        %613 = vmatpush1.msra.mxu0 %v530
        %614 = vmatprep.subr.mxu0 0.0
        %615 = vmatpush1.msra.mxu0 0.0
        %616 = vmatprep.subr.mxu0 0.0
        %617 = vmatpush1.msra.mxu0 0.0
        %618 = vmatprep.subr.mxu0 0.0
        %619 = vmatpush1.msra.mxu0 0.0
        %620 = vmatprep.subr.mxu0 0.0
        %621 = vmatpush1.msra.mxu0 0.0
        %622 = vmatprep.subr.mxu0 0.0
        %623 = vmatpush1.msra.mxu0 0.0
        %624 = vmatprep.subr.mxu0 0.0
        %625 = vmatpush1.msra.mxu0 0.0
        %626 = vmatprep.subr.mxu0 0.0
        %627 = vmatpush1.msra.mxu0 0.0
        %628 = vmatprep.subr.mxu0 0.0
        %629 = vmatpush1.msra.mxu0 0.0
        %630 = vmatprep.subr.mxu0 0.0
        %631 = vmatpush1.msra.mxu0 0.0
        %632 = vmatprep.subr.mxu0 0.0
        %633 = vmatpush1.msra.mxu0 0.0
        %634 = vmatprep.subr.mxu0 0.0
        %635 = vmatpush1.msra.mxu0 0.0
        %636 = vmatprep.subr.mxu0 0.0
        %637 = vmatpush1.msra.mxu0 0.0
        %638 = vmatprep.subr.mxu0 0.0
        %639 = vmatpush1.msra.mxu0 0.0
        %640 = vmatprep.subr.mxu0 0.0
        %641 = vmatpush1.msra.mxu0 0.0
        %642 = vmatprep.subr.mxu0 0.0
        %643 = vmatpush1.msra.mxu0 0.0
        %644 = vmatprep.subr.mxu0 0.0
        %645 = vmatpush1.msra.mxu0 0.0
        %646 = vmatprep.subr.mxu0 0.0
        %647 = vmatpush1.msra.mxu0 0.0
        %648 = vmatprep.subr.mxu0 0.0
        %649 = vmatpush1.msra.mxu0 0.0
        %650 = vmatprep.subr.mxu0 0.0
        %651 = vmatpush1.msra.mxu0 0.0
        %652 = vmatprep.subr.mxu0 0.0
        %653 = vmatpush1.msra.mxu0 0.0
        %654 = vmatprep.subr.mxu0 0.0
        %655 = vmatpush1.msra.mxu0 0.0
        %656 = vmatprep.subr.mxu0 0.0
        %657 = vmatpush1.msra.mxu0 0.0
        %658 = vmatprep.subr.mxu0 0.0
        %659 = vmatpush1.msra.mxu0 0.0
        %660 = vmatprep.subr.mxu0 0.0
        %661 = vmatpush1.msra.mxu0 0.0
        %662 = vmatprep.subr.mxu0 0.0
        %663 = vmatpush1.msra.mxu0 0.0
        %664 = vmatprep.subr.mxu0 0.0
        %665 = vmatpush1.msra.mxu0 0.0
        %666 = vmatprep.subr.mxu0 0.0
        %667 = vmatpush1.msra.mxu0 0.0
        %668 = vmatprep.subr.mxu0 0.0
        %669 = vmatpush1.msra.mxu0 0.0
        %670 = vmatprep.subr.mxu0 0.0
        %671 = vmatpush1.msra.mxu0 0.0
        %672 = vmatprep.subr.mxu0 0.0
        %673 = vmatpush1.msra.mxu0 0.0
        %674 = vmatprep.mubr.f32.mxu0 0.0
        %675 = vmatmul.mubr.f32.gmra.mrb[0].mxu0 %v608
        %v676 = vpop.f32.mrb[0].mxu0
        %v677 = vadd.f32 %v603, %v676
        %v678 = vpop.f32.mrb[0].mxu0
        %679 = vdwg.mxu0
        %v680 = vld [vmem:[%s4] sm:$0x1]
        %v682 = vlaneseq
        %v683 = vshrl.u32 %v682, 7
        %v684 = vsub.s32 0, %v683
        %v685 = vrot.slane %v680, %v684
        %v687 = vadd.f32 %v677, %v685
        %v688 = vmax.f32 %v687, 0.0
        %v689 = vld [vmem:[%s5] sm:$0xff]
        %v690 = vld [vmem:[%s5 + $0x8] sm:$0xff]
        %v691 = vld [vmem:[%s5 + $0x10] sm:$0xff]
        %v692 = vld [vmem:[%s5 + $0x18] sm:$0xff]
        %v693 = vld [vmem:[%s6] sm:$0x1]
        %v695 = vlaneseq
        %v696 = vshrl.u32 %v695, 7
        %v697 = vsub.s32 0, %v696
        %v698 = vrot.slane %v693, %v697
        %vm700 = vcmask 261120
        %v702 = vsel %vm700, %v688, 0
        %704 = vmatprep.subr.mxu0 0.0
        %705 = vmatpush1.msra.mxu0 %v689
        %706 = vmatprep.subr.mxu0 0.0
        %707 = vmatpush1.msra.mxu0 %v690
        %708 = vmatprep.subr.mxu0 0.0
        %709 = vmatpush1.msra.mxu0 %v691
        %710 = vmatprep.subr.mxu0 0.0
        %711 = vmatpush1.msra.mxu0 %v692
        %712 = vmatprep.subr.mxu0 0.0
        %713 = vmatpush1.msra.mxu0 0.0
        %714 = vmatprep.subr.mxu0 0.0
        %715 = vmatpush1.msra.mxu0 0.0
        %716 = vmatprep.subr.mxu0 0.0
        %717 = vmatpush1.msra.mxu0 0.0
        %718 = vmatprep.subr.mxu0 0.0
        %719 = vmatpush1.msra.mxu0 0.0
        %720 = vmatprep.subr.mxu0 0.0
        %721 = vmatpush1.msra.mxu0 0.0
        %722 = vmatprep.subr.mxu0 0.0
        %723 = vmatpush1.msra.mxu0 0.0
        %724 = vmatprep.subr.mxu0 0.0
        %725 = vmatpush1.msra.mxu0 0.0
        %726 = vmatprep.subr.mxu0 0.0
        %727 = vmatpush1.msra.mxu0 0.0
        %728 = vmatprep.subr.mxu0 0.0
        %729 = vmatpush1.msra.mxu0 0.0
        %730 = vmatprep.subr.mxu0 0.0
        %731 = vmatpush1.msra.mxu0 0.0
        %732 = vmatprep.subr.mxu0 0.0
        %733 = vmatpush1.msra.mxu0 0.0
        %734 = vmatprep.subr.mxu0 0.0
        %735 = vmatpush1.msra.mxu0 0.0
        %736 = vmatprep.subr.mxu0 0.0
        %737 = vmatpush1.msra.mxu0 0.0
        %738 = vmatprep.subr.mxu0 0.0
        %739 = vmatpush1.msra.mxu0 0.0
        %740 = vmatprep.subr.mxu0 0.0
        %741 = vmatpush1.msra.mxu0 0.0
        %742 = vmatprep.subr.mxu0 0.0
        %743 = vmatpush1.msra.mxu0 0.0
        %744 = vmatprep.subr.mxu0 0.0
        %745 = vmatpush1.msra.mxu0 0.0
        %746 = vmatprep.subr.mxu0 0.0
        %747 = vmatpush1.msra.mxu0 0.0
        %748 = vmatprep.subr.mxu0 0.0
        %749 = vmatpush1.msra.mxu0 0.0
        %750 = vmatprep.subr.mxu0 0.0
        %751 = vmatpush1.msra.mxu0 0.0
        %752 = vmatprep.subr.mxu0 0.0
        %753 = vmatpush1.msra.mxu0 0.0
        %754 = vmatprep.subr.mxu0 0.0
        %755 = vmatpush1.msra.mxu0 0.0
        %756 = vmatprep.subr.mxu0 0.0
        %757 = vmatpush1.msra.mxu0 0.0
        %758 = vmatprep.subr.mxu0 0.0
        %759 = vmatpush1.msra.mxu0 0.0
        %760 = vmatprep.subr.mxu0 0.0
        %761 = vmatpush1.msra.mxu0 0.0
        %762 = vmatprep.subr.mxu0 0.0
        %763 = vmatpush1.msra.mxu0 0.0
        %764 = vmatprep.subr.mxu0 0.0
        %765 = vmatpush1.msra.mxu0 0.0
        %766 = vmatprep.subr.mxu0 0.0
        %767 = vmatpush1.msra.mxu0 0.0
        %768 = vmatprep.mubr.f32.mxu0 0.0
        %769 = vmatmul.mubr.f32.gmra.mrb[0].mxu0 %v702
        %v770 = vpop.f32.mrb[0].mxu0
        %v771 = vadd.f32 %v698, %v770
        %v772 = vpop.f32.mrb[0].mxu0
        %773 = vdwg.mxu0
        %v774 = vld [vmem:[%s7] sm:$0xff]
        %v775 = vld [vmem:[%s7 + $0x8] sm:$0xff]
        %v776 = vld [vmem:[%s7 + $0x10] sm:$0xff]
        %v777 = vld [vmem:[%s7 + $0x18] sm:$0xff]
        %v778 = vld [vmem:[%s8] sm:$0x1]
        %v780 = vlaneseq
        %v781 = vshrl.u32 %v780, 7
        %v782 = vsub.s32 0, %v781
        %v783 = vrot.slane %v778, %v782
        %v786 = vsel %vm700, %v771, 0
        %788 = vmatprep.subr.mxu0 0.0
        %789 = vmatpush1.msra.mxu0 %v774
        %790 = vmatprep.subr.mxu0 0.0
        %791 = vmatpush1.msra.mxu0 %v775
        %792 = vmatprep.subr.mxu0 0.0
        %793 = vmatpush1.msra.mxu0 %v776
        %794 = vmatprep.subr.mxu0 0.0
        %795 = vmatpush1.msra.mxu0 %v777
        %796 = vmatprep.subr.mxu0 0.0
        %797 = vmatpush1.msra.mxu0 0.0
        %798 = vmatprep.subr.mxu0 0.0
        %799 = vmatpush1.msra.mxu0 0.0
        %800 = vmatprep.subr.mxu0 0.0
        %801 = vmatpush1.msra.mxu0 0.0
        %802 = vmatprep.subr.mxu0 0.0
        %803 = vmatpush1.msra.mxu0 0.0
        %804 = vmatprep.subr.mxu0 0.0
        %805 = vmatpush1.msra.mxu0 0.0
        %806 = vmatprep.subr.mxu0 0.0
        %807 = vmatpush1.msra.mxu0 0.0
        %808 = vmatprep.subr.mxu0 0.0
        %809 = vmatpush1.msra.mxu0 0.0
        %810 = vmatprep.subr.mxu0 0.0
        %811 = vmatpush1.msra.mxu0 0.0
        %812 = vmatprep.subr.mxu0 0.0
        %813 = vmatpush1.msra.mxu0 0.0
        %814 = vmatprep.subr.mxu0 0.0
        %815 = vmatpush1.msra.mxu0 0.0
        %816 = vmatprep.subr.mxu0 0.0
        %817 = vmatpush1.msra.mxu0 0.0
        %818 = vmatprep.subr.mxu0 0.0
        %819 = vmatpush1.msra.mxu0 0.0
        %820 = vmatprep.subr.mxu0 0.0
        %821 = vmatpush1.msra.mxu0 0.0
        %822 = vmatprep.subr.mxu0 0.0
        %823 = vmatpush1.msra.mxu0 0.0
        %824 = vmatprep.subr.mxu0 0.0
        %825 = vmatpush1.msra.mxu0 0.0
        %826 = vmatprep.subr.mxu0 0.0
        %827 = vmatpush1.msra.mxu0 0.0
        %828 = vmatprep.subr.mxu0 0.0
        %829 = vmatpush1.msra.mxu0 0.0
        %830 = vmatprep.subr.mxu0 0.0
        %831 = vmatpush1.msra.mxu0 0.0
        %832 = vmatprep.subr.mxu0 0.0
        %833 = vmatpush1.msra.mxu0 0.0
        %834 = vmatprep.subr.mxu0 0.0
        %835 = vmatpush1.msra.mxu0 0.0
        %836 = vmatprep.subr.mxu0 0.0
        %837 = vmatpush1.msra.mxu0 0.0
        %838 = vmatprep.subr.mxu0 0.0
        %839 = vmatpush1.msra.mxu0 0.0
        %840 = vmatprep.subr.mxu0 0.0
        %841 = vmatpush1.msra.mxu0 0.0
        %842 = vmatprep.subr.mxu0 0.0
        %843 = vmatpush1.msra.mxu0 0.0
        %844 = vmatprep.subr.mxu0 0.0
        %845 = vmatpush1.msra.mxu0 0.0
        %846 = vmatprep.subr.mxu0 0.0
        %847 = vmatpush1.msra.mxu0 0.0
        %848 = vmatprep.subr.mxu0 0.0
        %849 = vmatpush1.msra.mxu0 0.0
        %850 = vmatprep.subr.mxu0 0.0
        %851 = vmatpush1.msra.mxu0 0.0
        %852 = vmatprep.mubr.f32.mxu0 0.0
        %853 = vmatmul.mubr.f32.gmra.mrb[0].mxu0 %v786
        %v854 = vpop.f32.mrb[0].mxu0
        %v855 = vadd.f32 %v783, %v854
        %v856 = vpop.f32.mrb[0].mxu0
        %857 = vdwg.mxu0
        %v858 = vxor.u32 %v855, 2147483648
        %v859 = vmul.f32 %v858, 1.442695
        %v860 = vpow.pop %v859
        %v861 = vadd.f32 %v860, 1.0
        %v862 = vrcp.pop %v861
        %v863 = vmul.f32 1.0, %v862
        %v864 = vmul.f32 %v771, %v863
        %v865 = vld [vmem:[%s9] sm:$0xff]
        %v866 = vld [vmem:[%s9 + $0x8] sm:$0xff]
        %v867 = vld [vmem:[%s9 + $0x10] sm:$0xff]
        %v868 = vld [vmem:[%s9 + $0x18] sm:$0xff]
        %v869 = vld [vmem:[%s10] sm:$0xff]
        %v870 = vld [vmem:[%s10 + $0x8] sm:$0xff]
        %871 = vmatprep.subr.mxu0 0.0
        %872 = vmatpush1.msra.mxu0 %v869
        %873 = vmatprep.subr.mxu0 0.0
        %874 = vmatpush1.msra.mxu0 %v870
        %875 = vmatprep.subr.mxu0 0.0
        %876 = vmatpush1.msra.mxu0 0.0
        %877 = vmatprep.subr.mxu0 0.0
        %878 = vmatpush1.msra.mxu0 0.0
        %879 = vmatprep.subr.mxu0 0.0
        %880 = vmatpush1.msra.mxu0 0.0
        %881 = vmatprep.subr.mxu0 0.0
        %882 = vmatpush1.msra.mxu0 0.0
        %883 = vmatprep.subr.mxu0 0.0
        %884 = vmatpush1.msra.mxu0 0.0
        %885 = vmatprep.subr.mxu0 0.0
        %886 = vmatpush1.msra.mxu0 0.0
        %887 = vmatprep.subr.mxu0 0.0
        %888 = vmatpush1.msra.mxu0 0.0
        %889 = vmatprep.subr.mxu0 0.0
        %890 = vmatpush1.msra.mxu0 0.0
        %891 = vmatprep.subr.mxu0 0.0
        %892 = vmatpush1.msra.mxu0 0.0
        %893 = vmatprep.subr.mxu0 0.0
        %894 = vmatpush1.msra.mxu0 0.0
        %895 = vmatprep.subr.mxu0 0.0
        %896 = vmatpush1.msra.mxu0 0.0
        %897 = vmatprep.subr.mxu0 0.0
        %898 = vmatpush1.msra.mxu0 0.0
        %899 = vmatprep.subr.mxu0 0.0
        %900 = vmatpush1.msra.mxu0 0.0
        %901 = vmatprep.subr.mxu0 0.0
        %902 = vmatpush1.msra.mxu0 0.0
        %903 = vmatprep.subr.mxu0 0.0
        %904 = vmatpush1.msra.mxu0 0.0
        %905 = vmatprep.subr.mxu0 0.0
        %906 = vmatpush1.msra.mxu0 0.0
        %907 = vmatprep.subr.mxu0 0.0
        %908 = vmatpush1.msra.mxu0 0.0
        %909 = vmatprep.subr.mxu0 0.0
        %910 = vmatpush1.msra.mxu0 0.0
        %911 = vmatprep.subr.mxu0 0.0
        %912 = vmatpush1.msra.mxu0 0.0
        %913 = vmatprep.subr.mxu0 0.0
        %914 = vmatpush1.msra.mxu0 0.0
        %915 = vmatprep.subr.mxu0 0.0
        %916 = vmatpush1.msra.mxu0 0.0
        %917 = vmatprep.subr.mxu0 0.0
        %918 = vmatpush1.msra.mxu0 0.0
        %919 = vmatprep.subr.mxu0 0.0
        %920 = vmatpush1.msra.mxu0 0.0
        %921 = vmatprep.subr.mxu0 0.0
        %922 = vmatpush1.msra.mxu0 0.0
        %923 = vmatprep.subr.mxu0 0.0
        %924 = vmatpush1.msra.mxu0 0.0
        %925 = vmatprep.subr.mxu0 0.0
        %926 = vmatpush1.msra.mxu0 0.0
        %927 = vmatprep.subr.mxu0 0.0
        %928 = vmatpush1.msra.mxu0 0.0
        %929 = vmatprep.subr.mxu0 0.0
        %930 = vmatpush1.msra.mxu0 0.0
        %931 = vmatprep.subr.mxu0 0.0
        %932 = vmatpush1.msra.mxu0 0.0
        %933 = vmatprep.subr.mxu0 0.0
        %934 = vmatpush1.msra.mxu0 0.0
        %935 = vmatprep.mubr.f32.mxu0 0.0
        %936 = vmatmul.mubr.f32.gmra.mrb[0].mxu0 %v608
        %v937 = vpop.f32.mrb[0].mxu0
        %v938 = vadd.f32 0.0, %v937
        %v939 = vpop.f32.mrb[0].mxu0
        %940 = vdwg.mxu0
        %v942 = vsel %vm700, %v864, 0
        %944 = vmatprep.subr.mxu0 0.0
        %945 = vmatpush1.msra.mxu0 %v865
        %946 = vmatprep.subr.mxu0 0.0
        %947 = vmatpush1.msra.mxu0 %v866
        %948 = vmatprep.subr.mxu0 0.0
        %949 = vmatpush1.msra.mxu0 %v867
        %950 = vmatprep.subr.mxu0 0.0
        %951 = vmatpush1.msra.mxu0 %v868
        %952 = vmatprep.subr.mxu0 0.0
        %953 = vmatpush1.msra.mxu0 0.0
        %954 = vmatprep.subr.mxu0 0.0
        %955 = vmatpush1.msra.mxu0 0.0
        %956 = vmatprep.subr.mxu0 0.0
        %957 = vmatpush1.msra.mxu0 0.0
        %958 = vmatprep.subr.mxu0 0.0
        %959 = vmatpush1.msra.mxu0 0.0
        %960 = vmatprep.subr.mxu0 0.0
        %961 = vmatpush1.msra.mxu0 0.0
        %962 = vmatprep.subr.mxu0 0.0
        %963 = vmatpush1.msra.mxu0 0.0
        %964 = vmatprep.subr.mxu0 0.0
        %965 = vmatpush1.msra.mxu0 0.0
        %966 = vmatprep.subr.mxu0 0.0
        %967 = vmatpush1.msra.mxu0 0.0
        %968 = vmatprep.subr.mxu0 0.0
        %969 = vmatpush1.msra.mxu0 0.0
        %970 = vmatprep.subr.mxu0 0.0
        %971 = vmatpush1.msra.mxu0 0.0
        %972 = vmatprep.subr.mxu0 0.0
        %973 = vmatpush1.msra.mxu0 0.0
        %974 = vmatprep.subr.mxu0 0.0
        %975 = vmatpush1.msra.mxu0 0.0
        %976 = vmatprep.subr.mxu0 0.0
        %977 = vmatpush1.msra.mxu0 0.0
        %978 = vmatprep.subr.mxu0 0.0
        %979 = vmatpush1.msra.mxu0 0.0
        %980 = vmatprep.subr.mxu0 0.0
        %981 = vmatpush1.msra.mxu0 0.0
        %982 = vmatprep.subr.mxu0 0.0
        %983 = vmatpush1.msra.mxu0 0.0
        %984 = vmatprep.subr.mxu0 0.0
        %985 = vmatpush1.msra.mxu0 0.0
        %986 = vmatprep.subr.mxu0 0.0
        %987 = vmatpush1.msra.mxu0 0.0
        %988 = vmatprep.subr.mxu0 0.0
        %989 = vmatpush1.msra.mxu0 0.0
        %990 = vmatprep.subr.mxu0 0.0
        %991 = vmatpush1.msra.mxu0 0.0
        %992 = vmatprep.subr.mxu0 0.0
        %993 = vmatpush1.msra.mxu0 0.0
        %994 = vmatprep.subr.mxu0 0.0
        %995 = vmatpush1.msra.mxu0 0.0
        %996 = vmatprep.subr.mxu0 0.0
        %997 = vmatpush1.msra.mxu0 0.0
        %998 = vmatprep.subr.mxu0 0.0
        %999 = vmatpush1.msra.mxu0 0.0
        %1000 = vmatprep.subr.mxu0 0.0
        %1001 = vmatpush1.msra.mxu0 0.0
        %1002 = vmatprep.subr.mxu0 0.0
        %1003 = vmatpush1.msra.mxu0 0.0
        %1004 = vmatprep.subr.mxu0 0.0
        %1005 = vmatpush1.msra.mxu0 0.0
        %1006 = vmatprep.subr.mxu0 0.0
        %1007 = vmatpush1.msra.mxu0 0.0
        %1008 = vmatprep.mubr.f32.mxu0 0.0
        %1009 = vmatmul.mubr.f32.gmra.mrb[0].mxu0 %v942
        %v1010 = vpop.f32.mrb[0].mxu0
        %v1011 = vadd.f32 %v938, %v1010
        %v1012 = vpop.f32.mrb[0].mxu0
        %1013 = vdwg.mxu0
        %v1014 = vld [vmem:[%s11] sm:$0x1]
        %v1016 = vlaneseq
        %v1017 = vshrl.u32 %v1016, 7
        %v1018 = vsub.s32 0, %v1017
        %v1019 = vrot.slane %v1014, %v1018
        %v1021 = vadd.f32 %v1011, %v1019
        %vm1022 = vcmask 195584
        %v1023 = vsel %vm1022, %v1021, 0.0
        %1024 = vadd.xlane.f32.xlu0 %v1023
        %v1025 = vpop.xlane.xlu0 %1024
        %v1026 = vrcp.pop 24.0
        %v1027 = vmul.f32 %v1025, %v1026
        %v1028 = vsub.f32 %v1021, %v1027
        %v1029 = vmul.f32 %v1028, %v1028
        %v1030 = vsel %vm1022, %v1029, 0.0
        %1031 = vadd.xlane.f32.xlu0 %v1030
        %v1032 = vpop.xlane.xlu0 %1031
        %v1033 = vmul.f32 %v1032, %v1026
        %v1034 = vadd.f32 %v1033, 1e-05
        %v1035 = vrsqrt.pop %v1034
        %v1036 = vmul.f32 %v1028, %v1035
        %v1037 = vld [vmem:[%s12] sm:$0x1]
        %v1039 = vlaneseq
        %v1040 = vshrl.u32 %v1039, 7
        %v1041 = vsub.s32 0, %v1040
        %v1042 = vrot.slane %v1037, %v1041
        %v1044 = vmul.f32 %v1036, %v1042
        %v1045 = vld [vmem:[%s13] sm:$0x1]
        %v1047 = vlaneseq
        %v1048 = vshrl.u32 %v1047, 7
        %v1049 = vsub.s32 0, %v1048
        %v1050 = vrot.slane %v1045, %v1049
        %v1052 = vadd.f32 %v1044, %v1050
        %1053 = vst.msk [vmem:[%s522] sm:$0xff] %vm1022, %v1052
        %s1054 = sand.u32 %s344, 1
        %s1055 = scalar_lea.sflag [#allocation4], %s1054
        %s1056 = sand.u32 %s344, 1
        %s1057 = smul.addr %s1056, 8
        %s1058 = scalar_lea.vmem [#allocation8], %s1057
        // Predicated region
        $region89: #{tpu_custom_call.1} parent=75 // pred_check
          %p1059 = pneg %p354
        $region90: #{tpu_custom_call.1} parent=75 // pred_check_branch
          %1061 = sbr.rel (%p1059) target = $region92
        $region91: #{tpu_custom_call.1} parent=75 // pred_region
          %s1063 = ssub.s32 128, 128
          %1064 = vsyncadd %s1055, %s1063
          %s1065 = smul.addr %s32, 128
          %s1066 = scalar_lea.hbm %s14, %s1065
          %s1068 = sshll.u32 %s1058, 4
          %s1069 = int_to_ptr.vmem [resolvable:$true] %s1068
          %1071 = dma.vmem_to_hbm [thread:$0]  %s1069, 128, %s1066, %s1055
        $region92: #{tpu_custom_call.1} parent=75 // pred_fallthru
          _
      $region76: #{tpu_custom_call.1} parent=5 // pred_fallthru
        _
      %p1072 = scmp.le.s32.totalorder 2, %s27
      // Predicated region
      $region93: #{tpu_custom_call.1} parent=5 // pred_check
        %p1073 = pneg %p1072
      $region94: #{tpu_custom_call.1} parent=5 // pred_check_branch
        %1075 = sbr.rel (%p1073) target = $region96
      $region95: #{tpu_custom_call.1} parent=5 // pred_region
        %s1076 = ssub.s32 %s27, 2
        // Predicated region
        $region97: #{tpu_custom_call.1} parent=95 // pred_check
          %p1077 = pneg %p360
        $region98: #{tpu_custom_call.1} parent=95 // pred_check_branch
          %1079 = sbr.rel (%p1077) target = $region100
        $region99: #{tpu_custom_call.1} parent=95 // pred_region
          %s1080 = sand.u32 %s345, 1
          %s1081 = scalar_lea.sflag [#allocation4], %s1080
          %s1082 = sand.u32 %s345, 1
          %s1083 = smul.addr %s1082, 8
          %s1084 = scalar_lea.vmem [#allocation8], %s1083
          %1085 = dma.done %s1081, 128
        $region100: #{tpu_custom_call.1} parent=95 // pred_fallthru
          _
      $region96: #{tpu_custom_call.1} parent=5 // pred_fallthru
        _
    $region6: #{tpu_custom_call.1} parent=1 // loop_footer
      %s31 = sadd.s32 1, %s27
    $region7: #{tpu_custom_call.1} parent=1 // loop_footer_branch
      %26 = sbr.rel target = $region3
    $region8: #{tpu_custom_call.1} parent=1 // loop_exit
      _
    %1086 = vsyncpa [#allocation3], 1
    %s1087 = scalar_lea.sflag [#allocation3], 1
    %1088 = vsyncpa %s1087, 1
    %1089 = vsyncpa [#allocation6], 1
    %1090 = vsyncpa [#allocation4], 1
    %s1091 = scalar_lea.sflag [#allocation4], 1
    %1092 = vsyncpa %s1091, 1

</llo_original>
